<compile_context>
chip_gen: v7x
topology: tpu7x:2x2x1
jax: 0.10.0
libtpu: 0.0.40
codegen_flags: <defaults>
</compile_context>

<pallas_src>
import math

import jax
import jax.numpy as jnp
from jax.experimental import pallas as pl
from jax.experimental.pallas import tpu as pltpu


def _round_up(n: int, m: int) -> int:
    return (n + m - 1) // m * m


def _largest_aligned_divisor(total: int, cap: int, align: int = 128) -> int:
    """Largest multiple of `align` that divides `total` and is <= cap."""
    cap = max(align, min(cap, total))
    cap = cap // align * align
    for cand in range(cap, 0, -align):
        if total % cand == 0:
            return cand
    return align


def _device_vmem_bytes() -> int:
    try:
        return int(pltpu.get_tpu_info().vmem_capacity_bytes)
    except Exception:
        return 64 << 20  # conservative (v7x per-TensorCore VMEM)


# ---------------------------------------------------------------------------
# Pass 1: fused matmul + bias + online (flash-style) logsumexp.
# ---------------------------------------------------------------------------
def _matmul_online_lse_kernel(x_ref, w_ref, b_ref, logits_ref, lse_ref,
                              m_sc, l_sc):
    # x_ref:      (tm, d_model)  compute dtype, resident across the vocab axis
    # w_ref:      (d_model, tn)  compute dtype
    # b_ref:      (1, tn)        f32
    # logits_ref: (tm, tn)       f32 output tile, index (i, v)
    # lse_ref:    (tm, 1)        f32 output, resident across the vocab axis
    # m_sc, l_sc: (tm, 1)        f32 running max / running sum-of-exp
    v = pl.program_id(1)
    nv = pl.num_programs(1)

    @pl.when(v == 0)
    def _():
        m_sc[...] = jnp.full_like(m_sc, -jnp.inf)
        l_sc[...] = jnp.zeros_like(l_sc)

    logits = jnp.dot(x_ref[...], w_ref[...],
                     preferred_element_type=jnp.float32)
    logits = logits + b_ref[...]
    logits_ref[...] = logits

    # Online logsumexp update (EUP/XLU work hides under the MXU matmul).
    m_prev = m_sc[...]
    m_new = jnp.maximum(m_prev, jnp.max(logits, axis=-1, keepdims=True))
    l_sc[...] = (l_sc[...] * jnp.exp(m_prev - m_new)
                 + jnp.sum(jnp.exp(logits - m_new), axis=-1, keepdims=True))
    m_sc[...] = m_new

    @pl.when(v == nv - 1)
    def _():
        lse_ref[...] = m_sc[...] + jnp.log(l_sc[...])


# ---------------------------------------------------------------------------
# Pass 2: out = logits - logsumexp  (pure elementwise, HBM-bandwidth bound).
# ---------------------------------------------------------------------------
def _normalize_kernel(logits_ref, lse_ref, o_ref):
    o_ref[...] = (logits_ref[...] - lse_ref[...]).astype(o_ref.dtype)


# ---------------------------------------------------------------------------
# Parameter prep (run ONCE, not per forward call).
# ---------------------------------------------------------------------------
def prepare_projection_params(weight_t, bias, *, compute_dtype=jnp.bfloat16,
                              vocab_align=128):
    """Cast the weight to the MXU compute dtype and pad the vocab dim once.

    weight_t: (d_model, vocab)  -- PyTorch nn.Linear weight, transposed.
    bias:     (vocab,)
    Returns (w_prepared[d_model, V_pad], bias_prepared[1, V_pad] f32, vocab).
    """
    d_model, vocab = weight_t.shape
    V_pad = _round_up(vocab, vocab_align)
    w = weight_t.astype(compute_dtype)
    b = bias.astype(jnp.float32)
    if V_pad != vocab:
        w = jnp.pad(w, ((0, 0), (0, V_pad - vocab)))
        # Huge negative f32 bias on padded columns -> contributes ~0 to the
        # logsumexp (bias must stay f32 for this to be safe).
        b = jnp.pad(b, (0, V_pad - vocab), constant_values=-1e30)
    return w, b.reshape(1, V_pad), vocab


# ---------------------------------------------------------------------------
# Forward: log_softmax(x @ W + b, axis=-1).
# ---------------------------------------------------------------------------
def projection_layer(x, w_prepared, bias_prepared, vocab, *,
                     tm=512, tn=512, out_dtype=None):
    """x: (batch, seq, d_model); w_prepared: (d_model, V_pad) in compute dtype;
    bias_prepared: (1, V_pad) f32; vocab: true vocab size.

    Returns log_softmax(x @ W + b, axis=-1) with shape (batch, seq, vocab).
    out_dtype defaults to x.dtype (pass bf16 to halve output bandwidth for
    inference; keep f32 if the log-probs feed a training loss).
    """
    batch, seq, d_model = x.shape
    d_model_w, V_pad = w_prepared.shape
    assert d_model_w == d_model
    assert V_pad >= vocab and V_pad % 128 == 0
    compute_dtype = w_prepared.dtype
    out_dtype = out_dtype or x.dtype
    M = batch * seq

    # Row / vocab tiles. Large tm cuts weight streaming; tn is a 128-aligned
    # divisor of V_pad (>=256 whenever possible for the 256x256 MXUs).
    tm = _round_up(max(tm, 8), 8)
    tm_eff = min(tm, _round_up(M, 8))
    M_pad = _round_up(M, tm_eff)
    tn_eff = _largest_aligned_divisor(V_pad, max(tn, 128), 128)

    x2 = x.reshape(M, d_model).astype(compute_dtype)
    if M_pad != M:
        x2 = jnp.pad(x2, ((0, M_pad - M), (0, 0)))

    grid = (M_pad // tm_eff, V_pad // tn_eff)
    # TODO(synk): for decode-sized M (grid[0]==1) on v7x, split the vocab axis
    # across the 2 TensorCores with per-core partial (m, l) and a tiny merge.

    c_isz = jnp.dtype(compute_dtype).itemsize
    o_isz = jnp.dtype(out_dtype).itemsize
    vmem_cap = _device_vmem_bytes()

    # Pass-1 VMEM: resident x tile + double-buffered weight/bias/logit tiles +
    # tiny lse / running-stat buffers.  Independent of vocab size.
    vmem_est1 = (2 * tm_eff * d_model * c_isz
                 + 2 * (d_model * tn_eff * c_isz + tn_eff * 4
                        + tm_eff * tn_eff * 4)
                 + 6 * tm_eff * 4)
    vmem_limit1 = int(min(max(vmem_est1 * 3 // 2 + (1 << 20), 32 << 20),
                          vmem_cap - (2 << 20)))

    cost1 = pl.CostEstimate(
        flops=2 * M_pad * d_model * V_pad,
        transcendentals=M_pad * V_pad + 2 * M_pad * grid[1],
        bytes_accessed=(M_pad * d_model * c_isz
                        + grid[0] * (d_model * V_pad * c_isz + V_pad * 4)
                        + M_pad * V_pad * 4 + M_pad * 4),
    )

    logits, lse = pl.pallas_call(
        _matmul_online_lse_kernel,
        out_shape=(jax.ShapeDtypeStruct((M_pad, V_pad), jnp.float32),
                   jax.ShapeDtypeStruct((M_pad, 1), jnp.float32)),
        grid_spec=pltpu.PrefetchScalarGridSpec(
            num_scalar_prefetch=0,
            grid=grid,
            in_specs=[
                pl.BlockSpec((tm_eff, d_model), lambda i, v: (i, 0)),
                pl.BlockSpec((d_model, tn_eff), lambda i, v: (0, v)),
                pl.BlockSpec((1, tn_eff), lambda i, v: (0, v)),
            ],
            out_specs=(
                pl.BlockSpec((tm_eff, tn_eff), lambda i, v: (i, v)),
                pl.BlockSpec((tm_eff, 1), lambda i, v: (i, 0)),
            ),
            scratch_shapes=[pltpu.VMEM((tm_eff, 1), jnp.float32),
                            pltpu.VMEM((tm_eff, 1), jnp.float32)],
        ),
        compiler_params=pltpu.CompilerParams(
            dimension_semantics=("parallel", "arbitrary"),
            vmem_limit_bytes=vmem_limit1),
        cost_estimate=cost1,
    )(x2, w_prepared, bias_prepared)

    # Pass 2: normalize.  Big lane-dense tiles, pure streaming.
    tm2 = tm_eff
    tn2 = _largest_aligned_divisor(V_pad, 2048, 128)
    grid2 = (M_pad // tm2, V_pad // tn2)
    vmem_est2 = 2 * (tm2 * tn2 * 4 + tm2 * 4 + tm2 * tn2 * o_isz)
    vmem_limit2 = int(min(max(vmem_est2 * 3 // 2 + (1 << 20), 32 << 20),
                          vmem_cap - (2 << 20)))

    out = pl.pallas_call(
        _normalize_kernel,
        out_shape=jax.ShapeDtypeStruct((M_pad, V_pad), out_dtype),
        grid_spec=pltpu.PrefetchScalarGridSpec(
            num_scalar_prefetch=0,
            grid=grid2,
            in_specs=[
                pl.BlockSpec((tm2, tn2), lambda i, v: (i, v)),
                pl.BlockSpec((tm2, 1), lambda i, v: (i, 0)),
            ],
            out_specs=pl.BlockSpec((tm2, tn2), lambda i, v: (i, v)),
        ),
        compiler_params=pltpu.CompilerParams(
            dimension_semantics=("parallel", "parallel"),
            vmem_limit_bytes=vmem_limit2),
    )(logits, lse)

    return out[:M, :vocab].reshape(batch, seq, vocab)


if __name__ == "__main__":
    # Small shapes consistent with the module's forward.
    batch, seq, d_model, vocab_size = 2, 8, 32, 128

    key = jax.random.PRNGKey(0)
    kx, kw, kb = jax.random.split(key, 3)

    # nn.Linear default init: U(-1/sqrt(d_model), 1/sqrt(d_model)).
    bound = 1.0 / math.sqrt(d_model)
    weight = jax.random.uniform(kw, (vocab_size, d_model), jnp.float32,
                                minval=-bound, maxval=bound)   # PyTorch layout
    bias = jax.random.uniform(kb, (vocab_size,), jnp.float32,
                              minval=-bound, maxval=bound)
    weight_t = weight.T                                        # (d_model, vocab)
    x = jax.random.normal(kx, (batch, seq, d_model), jnp.float32)

    ref = jax.nn.log_softmax(x @ weight_t + bias, axis=-1)

    # 1) f32 compute path — strict check.
    w_f32, b_prep, vocab = prepare_projection_params(
        weight_t, bias, compute_dtype=jnp.float32)
    out_f32 = jax.block_until_ready(
        projection_layer(x, w_f32, b_prep, vocab))
    assert out_f32.shape == (batch, seq, vocab_size)
    assert jnp.allclose(out_f32, ref, atol=1e-5, rtol=1e-5)

    # 2) bf16 MXU fast path (production default) — looser tolerance from bf16.
    w_bf16, b_prep2, vocab = prepare_projection_params(
        weight_t, bias, compute_dtype=jnp.bfloat16)
    out_bf16 = jax.block_until_ready(
        projection_layer(x, w_bf16, b_prep2, vocab))
    assert jnp.allclose(out_bf16, ref, atol=5e-2, rtol=0)

    # 3) Ragged rows AND ragged/multi-tile vocab (exercises row padding, the
    #    -1e30 padded-column path and the multi-step online logsumexp).
    b2_, s2_, v2_ = 3, 5, 200                                  # M=15, vocab=200
    x_b = jax.random.normal(kx, (b2_, s2_, d_model), jnp.float32)
    w_b = jax.random.uniform(kw, (d_model, v2_), jnp.float32,
                             minval=-bound, maxval=bound)
    bias_b = jax.random.uniform(kb, (v2_,), jnp.float32,
                                minval=-bound, maxval=bound)
    ref_b = jax.nn.log_softmax(x_b @ w_b + bias_b, axis=-1)
    w_bp, bias_bp, vocab_b = prepare_projection_params(
        w_b, bias_b, compute_dtype=jnp.float32)
    out_b = jax.block_until_ready(
        projection_layer(x_b, w_bp, bias_bp, vocab_b, tn=128))
    assert out_b.shape == (b2_, s2_, v2_)
    assert jnp.allclose(out_b, ref_b, atol=1e-5, rtol=1e-5)

    print("KERNEL_OK")
</pallas_src>

<mosaic_0001>
module attributes {stable_mosaic.version = 11 : i64} {
  func.func @_matmul_online_lse_kernel(%arg0: i32, %arg1: i32, %arg2: memref<16x32xf32, #tpu.memory_space<vmem>>, %arg3: memref<32x128xf32, #tpu.memory_space<vmem>>, %arg4: memref<1x128xf32, #tpu.memory_space<vmem>>, %arg5: memref<16x128xf32, #tpu.memory_space<vmem>>, %arg6: memref<16x1xf32, #tpu.memory_space<vmem>>, %arg7: memref<16x1xf32, #tpu.memory_space<vmem>>, %arg8: memref<16x1xf32, #tpu.memory_space<vmem>>) attributes {dimension_semantics = [#tpu.dimension_semantics<parallel>, #tpu.dimension_semantics<arbitrary>], iteration_bounds = array<i64: 1, 1>, scalar_prefetch = 0 : i64, scratch_operands = 2 : i64, tpu.core_type = #tpu.core_type<tc>, window_params = [{transform_indices = @transform_0, window_bounds = array<i64: 16, 32>}, {transform_indices = @transform_1, window_bounds = array<i64: 32, 128>}, {transform_indices = @transform_2, window_bounds = array<i64: 1, 128>}, {transform_indices = @transform_3, window_bounds = array<i64: 16, 128>}, {transform_indices = @transform_4, window_bounds = array<i64: 16, 1>}]} {
    %c0_i32 = arith.constant 0 : i32
    %0 = arith.cmpi eq, %arg1, %c0_i32 : i32
    %1 = arith.extui %0 : i1 to i32
    %c0_i32_0 = arith.constant 0 : i32
    %2 = arith.cmpi ne, %1, %c0_i32_0 : i32
    scf.if %2 {
      %cst_20 = arith.constant 0xFF800000 : f32
      %29 = vector.broadcast %cst_20 : f32 to vector<16x1xf32>
      %c0_21 = arith.constant 0 : index
      %c0_22 = arith.constant 0 : index
      %30 = vector.load %arg7[%c0_21, %c0_22] : memref<16x1xf32, #tpu.memory_space<vmem>>, vector<16x1xf32>
      tpu.vector_store %arg7[%c0_21, %c0_22], %29 {strides = array<i32>} : memref<16x1xf32, #tpu.memory_space<vmem>>, vector<16x1xf32>,
      %cst_23 = arith.constant 0.000000e+00 : f32
      %31 = vector.broadcast %cst_23 : f32 to vector<16x1xf32>
      %c0_24 = arith.constant 0 : index
      %c0_25 = arith.constant 0 : index
      %32 = vector.load %arg8[%c0_24, %c0_25] : memref<16x1xf32, #tpu.memory_space<vmem>>, vector<16x1xf32>
      tpu.vector_store %arg8[%c0_24, %c0_25], %31 {strides = array<i32>} : memref<16x1xf32, #tpu.memory_space<vmem>>, vector<16x1xf32>,
    } else {
    }
    %c0 = arith.constant 0 : index
    %c0_1 = arith.constant 0 : index
    %3 = vector.load %arg2[%c0, %c0_1] : memref<16x32xf32, #tpu.memory_space<vmem>>, vector<16x32xf32>
    %c0_2 = arith.constant 0 : index
    %c0_3 = arith.constant 0 : index
    %4 = vector.load %arg3[%c0_2, %c0_3] : memref<32x128xf32, #tpu.memory_space<vmem>>, vector<32x128xf32>
    %cst = arith.constant dense<0.000000e+00> : vector<16x128xf32>
    %5 = tpu.matmul %3, %4, %cst {dimension_numbers = #tpu.dot_dimension_numbers<[1], [0], [0], [1], [0, 0, 1, 1], [], []>} : vector<16x32xf32>, vector<32x128xf32>, vector<16x128xf32> -> vector<16x128xf32>
    %c0_4 = arith.constant 0 : index
    %c0_5 = arith.constant 0 : index
    %6 = vector.load %arg4[%c0_4, %c0_5] : memref<1x128xf32, #tpu.memory_space<vmem>>, vector<1x128xf32>
    %7 = vector.broadcast %6 : vector<1x128xf32> to vector<16x128xf32>
    %8 = arith.addf %5, %7 : vector<16x128xf32>
    %c0_6 = arith.constant 0 : index
    %c0_7 = arith.constant 0 : index
    %9 = vector.load %arg5[%c0_6, %c0_7] : memref<16x128xf32, #tpu.memory_space<vmem>>, vector<16x128xf32>
    tpu.vector_store %arg5[%c0_6, %c0_7], %8 {strides = array<i32>} : memref<16x128xf32, #tpu.memory_space<vmem>>, vector<16x128xf32>,
    %c0_8 = arith.constant 0 : index
    %c0_9 = arith.constant 0 : index
    %10 = vector.load %arg7[%c0_8, %c0_9] : memref<16x1xf32, #tpu.memory_space<vmem>>, vector<16x1xf32>
    %cst_10 = arith.constant dense<0xFF800000> : vector<16xf32>
    %11 = vector.multi_reduction <maximumf>, %8, %cst_10 [1] : vector<16x128xf32> to vector<16xf32>
    %12 = vector.shape_cast %11 : vector<16xf32> to vector<16x1xf32>
    %13 = arith.maximumf %10, %12 : vector<16x1xf32>
    %c0_11 = arith.constant 0 : index
    %c0_12 = arith.constant 0 : index
    %14 = vector.load %arg8[%c0_11, %c0_12] : memref<16x1xf32, #tpu.memory_space<vmem>>, vector<16x1xf32>
    %15 = arith.subf %10, %13 : vector<16x1xf32>
    %16 = math.exp %15 : vector<16x1xf32>
    %17 = arith.mulf %14, %16 : vector<16x1xf32>
    %18 = vector.broadcast %13 : vector<16x1xf32> to vector<16x128xf32>
    %19 = arith.subf %8, %18 : vector<16x128xf32>
    %20 = math.exp %19 : vector<16x128xf32>
    %cst_13 = arith.constant dense<0.000000e+00> : vector<16xf32>
    %21 = vector.multi_reduction <add>, %20, %cst_13 [1] : vector<16x128xf32> to vector<16xf32>
    %22 = vector.shape_cast %21 : vector<16xf32> to vector<16x1xf32>
    %23 = arith.addf %17, %22 : vector<16x1xf32>
    %c0_14 = arith.constant 0 : index
    %c0_15 = arith.constant 0 : index
    %24 = vector.load %arg8[%c0_14, %c0_15] : memref<16x1xf32, #tpu.memory_space<vmem>>, vector<16x1xf32>
    tpu.vector_store %arg8[%c0_14, %c0_15], %23 {strides = array<i32>} : memref<16x1xf32, #tpu.memory_space<vmem>>, vector<16x1xf32>,
    %c0_16 = arith.constant 0 : index
    %c0_17 = arith.constant 0 : index
    %25 = vector.load %arg7[%c0_16, %c0_17] : memref<16x1xf32, #tpu.memory_space<vmem>>, vector<16x1xf32>
    tpu.vector_store %arg7[%c0_16, %c0_17], %13 {strides = array<i32>} : memref<16x1xf32, #tpu.memory_space<vmem>>, vector<16x1xf32>,
    %c0_i32_18 = arith.constant 0 : i32
    %26 = arith.cmpi eq, %arg1, %c0_i32_18 : i32
    %27 = arith.extui %26 : i1 to i32
    %c0_i32_19 = arith.constant 0 : i32
    %28 = arith.cmpi ne, %27, %c0_i32_19 : i32
    scf.if %28 {
      %c0_20 = arith.constant 0 : index
      %c0_21 = arith.constant 0 : index
      %29 = vector.load %arg7[%c0_20, %c0_21] : memref<16x1xf32, #tpu.memory_space<vmem>>, vector<16x1xf32>
      %c0_22 = arith.constant 0 : index
      %c0_23 = arith.constant 0 : index
      %30 = vector.load %arg8[%c0_22, %c0_23] : memref<16x1xf32, #tpu.memory_space<vmem>>, vector<16x1xf32>
      %31 = math.log %30 : vector<16x1xf32>
      %32 = arith.addf %29, %31 : vector<16x1xf32>
      %c0_24 = arith.constant 0 : index
      %c0_25 = arith.constant 0 : index
      %33 = vector.load %arg6[%c0_24, %c0_25] : memref<16x1xf32, #tpu.memory_space<vmem>>, vector<16x1xf32>
      tpu.vector_store %arg6[%c0_24, %c0_25], %32 {strides = array<i32>} : memref<16x1xf32, #tpu.memory_space<vmem>>, vector<16x1xf32>,
    } else {
    }
    return
  }
  func.func @transform_0(%arg0: i32, %arg1: i32) -> (i32, i32) {
    %c0_i32 = arith.constant 0 : i32
    %c0_i32_0 = arith.constant 0 : i32
    return %arg0, %c0_i32 : i32, i32
  }
  func.func @transform_1(%arg0: i32, %arg1: i32) -> (i32, i32) {
    %c0_i32 = arith.constant 0 : i32
    %c0_i32_0 = arith.constant 0 : i32
    return %c0_i32, %arg1 : i32, i32
  }
  func.func @transform_2(%arg0: i32, %arg1: i32) -> (i32, i32) {
    %c0_i32 = arith.constant 0 : i32
    %c0_i32_0 = arith.constant 0 : i32
    return %c0_i32, %arg1 : i32, i32
  }
  func.func @transform_3(%arg0: i32, %arg1: i32) -> (i32, i32) {
    %c0_i32 = arith.constant 0 : i32
    return %arg0, %arg1 : i32, i32
  }
  func.func @transform_4(%arg0: i32, %arg1: i32) -> (i32, i32) {
    %c0_i32 = arith.constant 0 : i32
    %c0_i32_0 = arith.constant 0 : i32
    return %arg0, %c0_i32 : i32, i32
  }
}

</mosaic_0001>

<llo_original>
// kernel: tpu_custom_call.1
$region0: #{tpu_custom_call.1}
  #allocation0 [shape = 'u32[]', space=smem, size = 0x4, offset = 0x4, fixed_abs, tag = 'smem constant byte address 0x4 - core index']
  #allocation1 [shape = 'u32[144,128]{1,0:T(1,128)}', space=vmem, size = 0x12000, scoped, tag = 'internal scratch']
  #allocation2 [shape = 'f32[16,1]{1,0:T(8,128)}', space=vmem, size = 0x2000, scoped, tag = 'scratch operand']
  #allocation3 [shape = 'f32[16,1]{1,0:T(8,128)}', space=vmem, size = 0x2000, scoped, tag = 'scratch operand']
  %s0 = inlined_call_operand.hbm [shape: f32[16,32], index: 0, kind: input, shape index: {}]
  %s1 = inlined_call_operand.hbm [shape: f32[32,128], index: 1, kind: input, shape index: {}]
  %s2 = inlined_call_operand.vmem [shape: f32[1,128], index: 2, kind: input, shape index: {}]
  %s3 = inlined_call_operand.hbm [shape: f32[16,128], index: 3, kind: output, shape index: {0}]
  %s4 = inlined_call_operand.vmem [shape: f32[16,1], index: 4, kind: output, shape index: {1}]
  %5 = xla_tuple %s3, %s4
  %s6 = sld [smem:[#allocation0]]
  $region46: #{tpu_custom_call.1} parent=0
    _
  %s8 = ssub.s32 1, %s6
  %s9 = scalar_select 0, %s8, %s6
  $region1: #{tpu_custom_call.1} parent=0
    #allocation4 [shape = 'u8[8192]{0}', space=vmem, size = 0x2000, scoped, tag = 'input window, operand 0, single buffered']
    #allocation5 [shape = 's32[1]{0}', space=sflag, size = 0x4, scoped, tag = 'scoped memory for tpu_custom_call.1']
    #allocation6 [shape = 's32[1]{0}', space=sflag, size = 0x4, scoped, tag = 'scoped memory for tpu_custom_call.1']
    #allocation7 [shape = 'u8[16384]{0}', space=vmem, size = 0x4000, scoped, tag = 'input window, operand 1, single buffered']
    #allocation8 [shape = 's32[1]{0}', space=sflag, size = 0x4, scoped, tag = 'scoped memory for tpu_custom_call.1']
    #allocation9 [shape = 'u8[8192]{0}', space=vmem, size = 0x2000, scoped, tag = 'output window, operand 0, single buffered']
    %10 = vsyncpa [#allocation5], 0
    %11 = vsyncpa [#allocation8], 0
    %12 = vsyncpa [#allocation6], 0
    // Predicated region
    $region2: #{tpu_custom_call.1} parent=1 // pred_check
      _
    $region3: #{tpu_custom_call.1} parent=1 // pred_check_branch
      %14 = sbr.rel (0) target = $region5
    $region4: #{tpu_custom_call.1} parent=1 // pred_region
      %s16 = ssub.s32 256, 256
      %17 = vsyncadd [#allocation5], %s16
      %s18 = sshll.u32 [#allocation4], 4
      %s19 = int_to_ptr.vmem [resolvable:$true] %s18
      %24 = dma.hbm_to_vmem [thread:$0]  %s0, 256, %s19, [#allocation5], 128, 128, 8
    $region5: #{tpu_custom_call.1} parent=1 // pred_fallthru
      _
    // Predicated region
    $region6: #{tpu_custom_call.1} parent=1 // pred_check
      _
    $region7: #{tpu_custom_call.1} parent=1 // pred_check_branch
      %26 = sbr.rel (0) target = $region9
    $region8: #{tpu_custom_call.1} parent=1 // pred_region
      %s28 = ssub.s32 512, 512
      %29 = vsyncadd [#allocation8], %s28
      %s30 = sshll.u32 [#allocation7], 4
      %s31 = int_to_ptr.vmem [resolvable:$true] %s30
      %36 = dma.hbm_to_vmem [thread:$0]  %s1, 512, %s31, [#allocation8], 128, 128, 8
    $region9: #{tpu_custom_call.1} parent=1 // pred_fallthru
      _
    // Predicated region
    $region10: #{tpu_custom_call.1} parent=1 // pred_check
      _
    $region11: #{tpu_custom_call.1} parent=1 // pred_check_branch
      %38 = sbr.rel (0) target = $region13
    $region12: #{tpu_custom_call.1} parent=1 // pred_region
      _
    $region13: #{tpu_custom_call.1} parent=1 // pred_fallthru
      _
    // Predicated region
    $region14: #{tpu_custom_call.1} parent=1 // pred_check
      _
    $region15: #{tpu_custom_call.1} parent=1 // pred_check_branch
      %40 = sbr.rel (0) target = $region17
    $region16: #{tpu_custom_call.1} parent=1 // pred_region
      %41 = dma.done [#allocation5], 256
    $region17: #{tpu_custom_call.1} parent=1 // pred_fallthru
      _
    // Predicated region
    $region18: #{tpu_custom_call.1} parent=1 // pred_check
      _
    $region19: #{tpu_custom_call.1} parent=1 // pred_check_branch
      %43 = sbr.rel (0) target = $region21
    $region20: #{tpu_custom_call.1} parent=1 // pred_region
      %44 = dma.done [#allocation8], 512
    $region21: #{tpu_custom_call.1} parent=1 // pred_fallthru
      _
    %p45 = scmp.eq.s32.totalorder 0, 0
    // Predicated region
    $region22: #{tpu_custom_call.1} parent=1 // pred_check
      %p46 = pneg %p45
    $region23: #{tpu_custom_call.1} parent=1 // pred_check_branch
      %48 = sbr.rel (%p46) target = $region25
    $region24: #{tpu_custom_call.1} parent=1 // pred_region
      %vm49 = vcmask 7168
      %50 = vst.msk [vmem:[#allocation2] sm:$0xff] %vm49, -inf
      %51 = vst.msk [vmem:[#allocation2 + $0x8] sm:$0xff] %vm49, -inf
      %52 = vst.msk [vmem:[#allocation3] sm:$0xff] %vm49, 0.0
      %53 = vst.msk [vmem:[#allocation3 + $0x8] sm:$0xff] %vm49, 0.0
    $region25: #{tpu_custom_call.1} parent=1 // pred_fallthru
      _
    %v54 = vld [vmem:[#allocation4] sm:$0xff]
    %v55 = vld [vmem:[#allocation4 + $0x8] sm:$0xff]
    %v56 = vld [vmem:[#allocation7] sm:$0xff]
    %v57 = vld [vmem:[#allocation7 + $0x8] sm:$0xff]
    %v58 = vld [vmem:[#allocation7 + $0x10] sm:$0xff]
    %v59 = vld [vmem:[#allocation7 + $0x18] sm:$0xff]
    %v60 = vld [vmem:[%s2] sm:$0x1]
    %v62 = vlaneseq
    %v63 = vshrl.u32 %v62, 7
    %v64 = vsub.s32 0, %v63
    %v65 = vrot.slane %v60, %v64
    %vm67 = vcmask 261120
    %v69 = vsel %vm67, %v54, 0
    %v72 = vsel %vm67, %v55, 0
    %74 = vmatprep.subr.mxu0 0.0
    %75 = vmatpush1.msra.mxu0 %v56
    %76 = vmatprep.subr.mxu0 0.0
    %77 = vmatpush1.msra.mxu0 %v57
    %78 = vmatprep.subr.mxu0 0.0
    %79 = vmatpush1.msra.mxu0 %v58
    %80 = vmatprep.subr.mxu0 0.0
    %81 = vmatpush1.msra.mxu0 %v59
    %82 = vmatprep.subr.mxu0 0.0
    %83 = vmatpush1.msra.mxu0 0.0
    %84 = vmatprep.subr.mxu0 0.0
    %85 = vmatpush1.msra.mxu0 0.0
    %86 = vmatprep.subr.mxu0 0.0
    %87 = vmatpush1.msra.mxu0 0.0
    %88 = vmatprep.subr.mxu0 0.0
    %89 = vmatpush1.msra.mxu0 0.0
    %90 = vmatprep.subr.mxu0 0.0
    %91 = vmatpush1.msra.mxu0 0.0
    %92 = vmatprep.subr.mxu0 0.0
    %93 = vmatpush1.msra.mxu0 0.0
    %94 = vmatprep.subr.mxu0 0.0
    %95 = vmatpush1.msra.mxu0 0.0
    %96 = vmatprep.subr.mxu0 0.0
    %97 = vmatpush1.msra.mxu0 0.0
    %98 = vmatprep.subr.mxu0 0.0
    %99 = vmatpush1.msra.mxu0 0.0
    %100 = vmatprep.subr.mxu0 0.0
    %101 = vmatpush1.msra.mxu0 0.0
    %102 = vmatprep.subr.mxu0 0.0
    %103 = vmatpush1.msra.mxu0 0.0
    %104 = vmatprep.subr.mxu0 0.0
    %105 = vmatpush1.msra.mxu0 0.0
    %106 = vmatprep.subr.mxu0 0.0
    %107 = vmatpush1.msra.mxu0 0.0
    %108 = vmatprep.subr.mxu0 0.0
    %109 = vmatpush1.msra.mxu0 0.0
    %110 = vmatprep.subr.mxu0 0.0
    %111 = vmatpush1.msra.mxu0 0.0
    %112 = vmatprep.subr.mxu0 0.0
    %113 = vmatpush1.msra.mxu0 0.0
    %114 = vmatprep.subr.mxu0 0.0
    %115 = vmatpush1.msra.mxu0 0.0
    %116 = vmatprep.subr.mxu0 0.0
    %117 = vmatpush1.msra.mxu0 0.0
    %118 = vmatprep.subr.mxu0 0.0
    %119 = vmatpush1.msra.mxu0 0.0
    %120 = vmatprep.subr.mxu0 0.0
    %121 = vmatpush1.msra.mxu0 0.0
    %122 = vmatprep.subr.mxu0 0.0
    %123 = vmatpush1.msra.mxu0 0.0
    %124 = vmatprep.subr.mxu0 0.0
    %125 = vmatpush1.msra.mxu0 0.0
    %126 = vmatprep.subr.mxu0 0.0
    %127 = vmatpush1.msra.mxu0 0.0
    %128 = vmatprep.subr.mxu0 0.0
    %129 = vmatpush1.msra.mxu0 0.0
    %130 = vmatprep.subr.mxu0 0.0
    %131 = vmatpush1.msra.mxu0 0.0
    %132 = vmatprep.subr.mxu0 0.0
    %133 = vmatpush1.msra.mxu0 0.0
    %134 = vmatprep.subr.mxu0 0.0
    %135 = vmatpush1.msra.mxu0 0.0
    %136 = vmatprep.subr.mxu0 0.0
    %137 = vmatpush1.msra.mxu0 0.0
    %138 = vmatprep.mubr.f32.mxu0 0.0
    %139 = vmatmul.mubr.f32.gmra.mrb[0].mxu0 %v69
    %v140 = vpop.f32.mrb[0].mxu0
    %v141 = vadd.f32 %v65, %v140
    %v142 = vpop.f32.mrb[0].mxu0
    %143 = vmatprep.mubr.f32.mxu0 0.0
    %144 = vmatmul.mubr.f32.gmra.mrb[0].mxu0 %v72
    %v145 = vpop.f32.mrb[0].mxu0
    %v146 = vadd.f32 %v65, %v145
    %v147 = vpop.f32.mrb[0].mxu0
    %148 = vdwg.mxu0
    %149 = vst [vmem:[#allocation9] sm:$0xff] %v141
    %150 = vst [vmem:[#allocation9 + $0x8] sm:$0xff] %v146
    %v151 = vld [vmem:[#allocation2] sm:$0xff]
    %v152 = vld [vmem:[#allocation2 + $0x8] sm:$0xff]
    %153 = vmax.xlane.f32.xlu0 %v141
    %v154 = vpop.xlane.xlu0 %153
    %155 = vmax.xlane.f32.xlu0 %v146
    %v156 = vpop.xlane.xlu0 %155
    %v157 = vmax.f32 %v151, %v154
    %v158 = vmax.f32 %v152, %v156
    %v159 = vld [vmem:[#allocation3] sm:$0xff]
    %v160 = vld [vmem:[#allocation3 + $0x8] sm:$0xff]
    %v161 = vsub.f32 %v151, %v157
    %v162 = vsub.f32 %v152, %v158
    %v163 = vmul.f32 %v161, 1.442695
    %v164 = vpow.pop %v163
    %v165 = vmul.f32 %v162, 1.442695
    %v166 = vpow.pop %v165
    %v167 = vmul.f32 %v159, %v164
    %v168 = vmul.f32 %v160, %v166
    %170 = vset.pattern.permute.xlu0 0
    %171 = vperm.xlu0 %170, %v157
    %v172 = vpop.permute.xlu0 %171
    %175 = vset.pattern.permute.xlu0 0
    %176 = vperm.xlu0 %175, %v158
    %v177 = vpop.permute.xlu0 %176
    %v179 = vsub.f32 %v141, %v172
    %v180 = vsub.f32 %v146, %v177
    %v181 = vmul.f32 %v179, 1.442695
    %v182 = vpow.pop %v181
    %v183 = vmul.f32 %v180, 1.442695
    %v184 = vpow.pop %v183
    %185 = vadd.xlane.f32.xlu0 %v182
    %v186 = vpop.xlane.xlu0 %185
    %187 = vadd.xlane.f32.xlu0 %v184
    %v188 = vpop.xlane.xlu0 %187
    %v189 = vadd.f32 %v167, %v186
    %v190 = vadd.f32 %v168, %v188
    %vm191 = vcmask 7168
    %192 = vst.msk [vmem:[#allocation3] sm:$0xff] %vm191, %v189
    %193 = vst.msk [vmem:[#allocation3 + $0x8] sm:$0xff] %vm191, %v190
    %194 = vst.msk [vmem:[#allocation2] sm:$0xff] %vm191, %v157
    %195 = vst.msk [vmem:[#allocation2 + $0x8] sm:$0xff] %vm191, %v158
    // Predicated region
    $region26: #{tpu_custom_call.1} parent=1 // pred_check
      %p196 = pneg %p45
    $region27: #{tpu_custom_call.1} parent=1 // pred_check_branch
      %198 = sbr.rel (%p196) target = $region29
    $region28: #{tpu_custom_call.1} parent=1 // pred_region
      %v199 = vld [vmem:[#allocation2] sm:$0xff]
      %v200 = vld [vmem:[#allocation2 + $0x8] sm:$0xff]
      %v201 = vld [vmem:[#allocation3] sm:$0xff]
      %v202 = vld [vmem:[#allocation3 + $0x8] sm:$0xff]
      %v203 = vlog2.pop %v201
      %v204 = vmul.f32 %v203, 0.6931472
      %v205 = vlog2.pop %v202
      %v206 = vmul.f32 %v205, 0.6931472
      %v207 = vadd.f32 %v199, %v204
      %v208 = vadd.f32 %v200, %v206
      %209 = vst.msk [vmem:[%s4] sm:$0xff] %vm191, %v207
      %210 = vst.msk [vmem:[%s4 + $0x8] sm:$0xff] %vm191, %v208
    $region29: #{tpu_custom_call.1} parent=1 // pred_fallthru
      _
    // Predicated region
    $region30: #{tpu_custom_call.1} parent=1 // pred_check
      _
    $region31: #{tpu_custom_call.1} parent=1 // pred_check_branch
      %212 = sbr.rel (0) target = $region33
    $region32: #{tpu_custom_call.1} parent=1 // pred_region
      %s214 = ssub.s32 256, 256
      %215 = vsyncadd [#allocation6], %s214
      %s216 = sshll.u32 [#allocation9], 4
      %s217 = int_to_ptr.vmem [resolvable:$true] %s216
      %222 = dma.vmem_to_hbm [thread:$0]  %s217, 256, %s3, [#allocation6], 128, 128, 8
    $region33: #{tpu_custom_call.1} parent=1 // pred_fallthru
      _
    // Predicated region
    $region34: #{tpu_custom_call.1} parent=1 // pred_check
      _
    $region35: #{tpu_custom_call.1} parent=1 // pred_check_branch
      %224 = sbr.rel (0) target = $region37
    $region36: #{tpu_custom_call.1} parent=1 // pred_region
      _
    $region37: #{tpu_custom_call.1} parent=1 // pred_fallthru
      _
    // Predicated region
    $region38: #{tpu_custom_call.1} parent=1 // pred_check
      _
    $region39: #{tpu_custom_call.1} parent=1 // pred_check_branch
      %226 = sbr.rel (0) target = $region41
    $region40: #{tpu_custom_call.1} parent=1 // pred_region
      %227 = dma.done [#allocation6], 256
    $region41: #{tpu_custom_call.1} parent=1 // pred_fallthru
      _
    // Predicated region
    $region42: #{tpu_custom_call.1} parent=1 // pred_check
      _
    $region43: #{tpu_custom_call.1} parent=1 // pred_check_branch
      %229 = sbr.rel (0) target = $region45
    $region44: #{tpu_custom_call.1} parent=1 // pred_region
      _
    $region45: #{tpu_custom_call.1} parent=1 // pred_fallthru
      _
    %230 = vsyncpa [#allocation5], 1
    %231 = vsyncpa [#allocation8], 1
    %232 = vsyncpa [#allocation6], 1

</llo_original>
